<compile_context>
chip_gen: v7x
topology: tpu7x:2x2x1
jax: 0.10.0
libtpu: 0.0.40
codegen_flags: <defaults>
</compile_context>

<pallas_src>
import functools

import jax
import jax.numpy as jnp
from jax.experimental import pallas as pl
from jax.experimental.pallas import tpu as pltpu


def _round_down(x, m):
    return (x // m) * m


def _round_up(x, m):
    return ((x + m - 1) // m) * m


def _tpu_budgets():
    """Generation-derived (input_budget_bytes, vmem_limit_bytes, num_cores)."""
    try:
        vmem = int(pltpu.get_tpu_info().vmem_capacity_bytes)
    except Exception:
        vmem = None
    if not vmem:
        # Unknown chip: conservative settings that compile everywhere.
        return 24 * 1024 * 1024, 32 * 1024 * 1024, 1
    # Leave ~25% of per-core VMEM (and never exceed ~100 MiB) for the
    # compiler's own scratch, output block and headroom.
    vmem_limit = min((vmem * 3) // 4, 100 * 1024 * 1024)
    input_budget = max(vmem_limit - 8 * 1024 * 1024, 8 * 1024 * 1024)
    # Small per-core VMEM (<= ~96 MiB) => v7x-class chip with 2 TensorCores:
    # split batch tiles across cores.  Single-TC chips keep a trivial axis.
    num_cores = 2 if vmem <= 96 * 1024 * 1024 else 1
    return input_budget, vmem_limit, num_cores


def _softce_kernel(logits_ref, targets_ref, out_ref, acc_ref, *,
                   batch, tile_rows, tiles_per_core, any_masking):
    c = pl.program_id(0)   # TensorCore split of batch tiles ("parallel")
    i = pl.program_id(1)   # reduction over this core's batch tiles ("arbitrary")

    @pl.when(i == 0)
    def _init():
        acc_ref[...] = jnp.zeros_like(acc_ref)

    # Stream at storage dtype; compute in f32.
    # TODO(synk): on v6e/v7x the elementwise path could stay in bf16 (bf16-native
    # VALU/EUP) and upcast only at the lane reductions; kept in f32 for v5e
    # compatibility and simplicity -- the kernel stays HBM-bound there.
    x = logits_ref[...].astype(jnp.float32)     # (tile_rows, C)
    t = targets_ref[...].astype(jnp.float32)    # (tile_rows, C)

    # Numerically stable log-softmax along the class (lane) axis, consumed in
    # the direct form sum(-t * logp): no catastrophic cancellation and only
    # three lane reductions per row (max, sum-exp, sum t*logp).
    m = jnp.max(x, axis=-1, keepdims=True)                            # (tile_rows, 1)
    xm = x - m
    lse = jnp.log(jnp.sum(jnp.exp(xm), axis=-1, keepdims=True))       # (tile_rows, 1)
    logp = xm - lse
    per_row = -jnp.sum(t * logp, axis=-1, keepdims=True)              # (tile_rows, 1)

    # INVARIANT: everything above is row-wise (axis=-1), so garbage rows in
    # padded / duplicated tiles cannot leak into real rows; the mask below
    # SELECTS (not multiplies), so even NaN/Inf garbage rows are dropped.
    if any_masking:
        v_tile = c * tiles_per_core + i            # virtual (unclamped) tile id
        tile_start = v_tile * tile_rows
        straddles = tile_start + tile_rows > batch

        @pl.when(jnp.logical_not(straddles))
        def _full_tile():
            acc_ref[...] += jnp.sum(per_row).reshape(1, 1)

        @pl.when(straddles)
        def _masked_tile():
            row_idx = (jax.lax.broadcasted_iota(jnp.int32, per_row.shape, 0)
                       + tile_start)
            acc_ref[...] += jnp.sum(
                jnp.where(row_idx < batch, per_row, 0.0)).reshape(1, 1)
    else:
        acc_ref[...] += jnp.sum(per_row).reshape(1, 1)

    @pl.when(i == tiles_per_core - 1)
    def _finalize():
        out_ref[...] = acc_ref[...].reshape(1, 1, 1)


def soft_ce(logits: jax.Array, soft_targets: jax.Array, reduction: str = "mean"):
    """SoftCE. logits, soft_targets: (B, C); class dim last (lane axis)."""
    assert logits.shape == soft_targets.shape
    assert logits.ndim == 2
    B, C = logits.shape

    input_budget, vmem_limit, num_cores = _tpu_budgets()

    l_bytes = jnp.dtype(logits.dtype).itemsize
    t_bytes = jnp.dtype(soft_targets.dtype).itemsize
    # Sublane alignment: 8 rows for 4-byte dtypes, 16 for 2-byte (bf16) packing.
    sub = 16 if min(l_bytes, t_bytes) < 4 else 8

    # Tile rows: as large as the double-buffered input tiles allow (no arbitrary
    # row cap) -- big tiles amortize the ~0.35us fixed per-grid-step cost.
    bytes_per_row = C * (l_bytes + t_bytes)
    cap = max(sub, _round_down(input_budget // (2 * bytes_per_row), sub))
    if num_cores > 1:
        # Keep >= ~2 real tiles per core so the megacore split stays balanced.
        cap = max(sub, min(cap, _round_up(pl.cdiv(B, 2 * num_cores), sub)))
    # TODO(synk): for extremely wide C that cannot fit even a `sub`-row tile in
    # VMEM, the class axis would need tiling with an online logsumexp.

    if B < sub:
        tile_rows = B                                   # block == full batch dim
    else:
        tile_rows = max(sub, min(cap, _round_down(B, sub)))

    n_tiles = pl.cdiv(B, tile_rows)
    tiles_per_core = pl.cdiv(n_tiles, num_cores)
    any_masking = (n_tiles * tile_rows != B) or (num_cores * tiles_per_core != n_tiles)

    # Never let the compiler window limit fall below what the chosen tiles need
    # (covers the forced-minimum-tile path for very wide C).
    vmem_limit = max(vmem_limit, 2 * tile_rows * bytes_per_row + (4 << 20))

    def in_index_map(c, i):
        # Clamp so a block never starts past the end of the array; out-of-range
        # virtual tiles are fully masked in-kernel (mask uses the virtual index).
        return (jnp.minimum(c * tiles_per_core + i, n_tiles - 1), 0)

    kernel = functools.partial(
        _softce_kernel, batch=B, tile_rows=tile_rows,
        tiles_per_core=tiles_per_core, any_masking=any_masking)

    partials = pl.pallas_call(
        kernel,
        out_shape=jax.ShapeDtypeStruct((num_cores, 1, 1), jnp.float32),
        grid_spec=pltpu.PrefetchScalarGridSpec(
            num_scalar_prefetch=0,
            grid=(num_cores, tiles_per_core),
            in_specs=[
                pl.BlockSpec((tile_rows, C), in_index_map),
                pl.BlockSpec((tile_rows, C), in_index_map),
            ],
            out_specs=pl.BlockSpec((1, 1, 1), lambda c, i: (c, 0, 0)),
            scratch_shapes=[pltpu.VMEM((1, 1), jnp.float32)],
        ),
        compiler_params=pltpu.CompilerParams(
            dimension_semantics=("parallel", "arbitrary"),
            vmem_limit_bytes=int(vmem_limit),
        ),
    )(logits, soft_targets)

    total = jnp.sum(partials)   # sum of per-row losses over the whole (true) batch
    if reduction == "mean":
        return total / B        # divide by the true B, not padded tiles
    elif reduction == "sum":
        return total
    elif reduction == "none":
        # TODO(synk): 'none' (per-row losses) is not emitted by this accumulator kernel.
        raise NotImplementedError("reduction='none' is not supported by the Pallas kernel")
    else:
        raise ValueError("Reduction type '{:s}' is not supported!".format(reduction))


def _soft_ce_ref(logits, soft_targets):
    logp = jax.nn.log_softmax(logits.astype(jnp.float32), axis=-1)
    return jnp.mean(jnp.sum(-soft_targets.astype(jnp.float32) * logp, axis=-1))


if __name__ == "__main__":
    key = jax.random.PRNGKey(0)
    k1, k2, k3, k4, k5, k6 = jax.random.split(key, 6)

    # Case 1: small, lane-aligned f32 problem (matches the trainer usage).
    B, C = 8, 128
    logits = jax.random.normal(k1, (B, C), dtype=jnp.float32)
    soft_targets = jax.nn.softmax(
        jax.random.normal(k2, (B, C), dtype=jnp.float32), axis=-1)
    loss = soft_ce(logits, soft_targets)
    jax.block_until_ready(loss)
    ref = _soft_ce_ref(logits, soft_targets)
    assert jnp.allclose(loss, ref, rtol=1e-5, atol=1e-5), (loss, ref)

    # Case 2: bf16 streaming, batch not a multiple of the tile (masked edge tile).
    B2, C2 = 37, 256
    logits2 = jax.random.normal(k3, (B2, C2), dtype=jnp.float32).astype(jnp.bfloat16)
    soft_targets2 = jax.nn.softmax(
        jax.random.normal(k4, (B2, C2), dtype=jnp.float32), axis=-1).astype(jnp.bfloat16)
    loss2 = soft_ce(logits2, soft_targets2)
    jax.block_until_ready(loss2)
    ref2 = _soft_ce_ref(logits2, soft_targets2)
    assert jnp.allclose(loss2, ref2, rtol=1e-4, atol=1e-4), (loss2, ref2)

    # Case 3: large-magnitude logits + peaky targets (stability of the direct
    # sum(-t*(x-m-lse)) form) and reduction='sum'.
    # TODO(synk): also worth a C-not-multiple-of-128 (e.g. C=130) lane-padding test.
    B3, C3 = 16, 128
    logits3 = 1e4 * jax.random.normal(k5, (B3, C3), dtype=jnp.float32)
    soft_targets3 = jax.nn.softmax(
        50.0 * jax.random.normal(k6, (B3, C3), dtype=jnp.float32), axis=-1)
    loss3 = soft_ce(logits3, soft_targets3, reduction="sum")
    jax.block_until_ready(loss3)
    logp3 = jax.nn.log_softmax(logits3, axis=-1)
    ref3 = jnp.sum(jnp.sum(-soft_targets3 * logp3, axis=-1))
    assert jnp.allclose(loss3, ref3, rtol=1e-3, atol=1e-2), (loss3, ref3)

    print("KERNEL_OK")
</pallas_src>

<mosaic_0001>
module attributes {stable_mosaic.version = 11 : i64} {
  func.func @_softce_kernel(%arg0: i32, %arg1: i32, %arg2: memref<8x128xf32, #tpu.memory_space<vmem>>, %arg3: memref<8x128xf32, #tpu.memory_space<vmem>>, %arg4: memref<1x1x1xf32, #tpu.memory_space<vmem>>, %arg5: memref<1x1xf32, #tpu.memory_space<vmem>>) attributes {dimension_semantics = [#tpu.dimension_semantics<parallel>, #tpu.dimension_semantics<arbitrary>], iteration_bounds = array<i64: 1, 1>, scalar_prefetch = 0 : i64, scratch_operands = 1 : i64, tpu.core_type = #tpu.core_type<tc>, window_params = [{transform_indices = @transform_0, window_bounds = array<i64: 8, 128>}, {transform_indices = @transform_1, window_bounds = array<i64: 8, 128>}, {transform_indices = @transform_2, window_bounds = array<i64: 1, 1, 1>}]} {
    %c0_i32 = arith.constant 0 : i32
    %0 = arith.cmpi eq, %arg1, %c0_i32 : i32
    %1 = arith.extui %0 : i1 to i32
    %c0_i32_0 = arith.constant 0 : i32
    %2 = arith.cmpi ne, %1, %c0_i32_0 : i32
    scf.if %2 {
      %cst_14 = arith.constant 0.000000e+00 : f32
      %31 = vector.broadcast %cst_14 : f32 to vector<1x1xf32>
      %c0_15 = arith.constant 0 : index
      %c0_16 = arith.constant 0 : index
      %32 = vector.load %arg5[%c0_15, %c0_16] : memref<1x1xf32, #tpu.memory_space<vmem>>, vector<1x1xf32>
      tpu.vector_store %arg5[%c0_15, %c0_16], %31 {strides = array<i32>} : memref<1x1xf32, #tpu.memory_space<vmem>>, vector<1x1xf32>,
    } else {
    }
    %c0 = arith.constant 0 : index
    %c0_1 = arith.constant 0 : index
    %3 = vector.load %arg2[%c0, %c0_1] : memref<8x128xf32, #tpu.memory_space<vmem>>, vector<8x128xf32>
    %c0_2 = arith.constant 0 : index
    %c0_3 = arith.constant 0 : index
    %4 = vector.load %arg3[%c0_2, %c0_3] : memref<8x128xf32, #tpu.memory_space<vmem>>, vector<8x128xf32>
    %cst = arith.constant dense<0xFF800000> : vector<8xf32>
    %5 = vector.multi_reduction <maximumf>, %3, %cst [1] : vector<8x128xf32> to vector<8xf32>
    %6 = vector.shape_cast %5 : vector<8xf32> to vector<8x1xf32>
    %7 = vector.broadcast %6 : vector<8x1xf32> to vector<8x128xf32>
    %8 = arith.subf %3, %7 : vector<8x128xf32>
    %9 = math.exp %8 : vector<8x128xf32>
    %cst_4 = arith.constant dense<0.000000e+00> : vector<8xf32>
    %10 = vector.multi_reduction <add>, %9, %cst_4 [1] : vector<8x128xf32> to vector<8xf32>
    %11 = vector.shape_cast %10 : vector<8xf32> to vector<8x1xf32>
    %12 = math.log %11 : vector<8x1xf32>
    %13 = vector.broadcast %12 : vector<8x1xf32> to vector<8x128xf32>
    %14 = arith.subf %8, %13 : vector<8x128xf32>
    %15 = arith.mulf %4, %14 : vector<8x128xf32>
    %cst_5 = arith.constant dense<0.000000e+00> : vector<8xf32>
    %16 = vector.multi_reduction <add>, %15, %cst_5 [1] : vector<8x128xf32> to vector<8xf32>
    %17 = vector.shape_cast %16 : vector<8xf32> to vector<8x1xf32>
    %cst_6 = arith.constant 0.000000e+00 : f32
    %18 = vector.broadcast %cst_6 : f32 to vector<8x1xf32>
    %19 = arith.subf %18, %17 : vector<8x1xf32>
    %c0_7 = arith.constant 0 : index
    %c0_8 = arith.constant 0 : index
    %20 = vector.load %arg5[%c0_7, %c0_8] : memref<1x1xf32, #tpu.memory_space<vmem>>, vector<1x1xf32>
    %21 = vector.shape_cast %19 : vector<8x1xf32> to vector<1x8x1xf32>
    %cst_9 = arith.constant dense<0.000000e+00> : vector<1xf32>
    %22 = vector.multi_reduction <add>, %21, %cst_9 [1, 2] : vector<1x8x1xf32> to vector<1xf32>
    %23 = vector.shape_cast %22 : vector<1xf32> to vector<1x1x1xf32>
    %24 = vector.extract %23[0, 0, 0] : f32 from vector<1x1x1xf32>
    %25 = vector.broadcast %24 : f32 to vector<1x1xf32>
    %26 = arith.addf %20, %25 : vector<1x1xf32>
    %c0_10 = arith.constant 0 : index
    %c0_11 = arith.constant 0 : index
    %27 = vector.load %arg5[%c0_10, %c0_11] : memref<1x1xf32, #tpu.memory_space<vmem>>, vector<1x1xf32>
    tpu.vector_store %arg5[%c0_10, %c0_11], %26 {strides = array<i32>} : memref<1x1xf32, #tpu.memory_space<vmem>>, vector<1x1xf32>,
    %c0_i32_12 = arith.constant 0 : i32
    %28 = arith.cmpi eq, %arg1, %c0_i32_12 : i32
    %29 = arith.extui %28 : i1 to i32
    %c0_i32_13 = arith.constant 0 : i32
    %30 = arith.cmpi ne, %29, %c0_i32_13 : i32
    scf.if %30 {
      %c0_14 = arith.constant 0 : index
      %c0_15 = arith.constant 0 : index
      %31 = vector.load %arg5[%c0_14, %c0_15] : memref<1x1xf32, #tpu.memory_space<vmem>>, vector<1x1xf32>
      %32 = vector.shape_cast %31 : vector<1x1xf32> to vector<1x1x1xf32>
      %c0_16 = arith.constant 0 : index
      %c0_17 = arith.constant 0 : index
      %c0_18 = arith.constant 0 : index
      %33 = vector.load %arg4[%c0_16, %c0_17, %c0_18] : memref<1x1x1xf32, #tpu.memory_space<vmem>>, vector<1x1x1xf32>
      tpu.vector_store %arg4[%c0_16, %c0_17, %c0_18], %32 {strides = array<i32>} : memref<1x1x1xf32, #tpu.memory_space<vmem>>, vector<1x1x1xf32>,
    } else {
    }
    return
  }
  func.func @transform_0(%arg0: i32, %arg1: i32) -> (i32, i32) {
    %c1_i32 = arith.constant 1 : i32
    %0 = arith.muli %arg0, %c1_i32 : i32
    %1 = arith.addi %0, %arg1 : i32
    %c0_i32 = arith.constant 0 : i32
    %2 = arith.minsi %1, %c0_i32 : i32
    %c0_i32_0 = arith.constant 0 : i32
    %c0_i32_1 = arith.constant 0 : i32
    return %2, %c0_i32_0 : i32, i32
  }
  func.func @transform_1(%arg0: i32, %arg1: i32) -> (i32, i32) {
    %c1_i32 = arith.constant 1 : i32
    %0 = arith.muli %arg0, %c1_i32 : i32
    %1 = arith.addi %0, %arg1 : i32
    %c0_i32 = arith.constant 0 : i32
    %2 = arith.minsi %1, %c0_i32 : i32
    %c0_i32_0 = arith.constant 0 : i32
    %c0_i32_1 = arith.constant 0 : i32
    return %2, %c0_i32_0 : i32, i32
  }
  func.func @transform_2(%arg0: i32, %arg1: i32) -> (i32, i32, i32) {
    %c0_i32 = arith.constant 0 : i32
    %c0_i32_0 = arith.constant 0 : i32
    %c0_i32_1 = arith.constant 0 : i32
    return %arg0, %c0_i32, %c0_i32_0 : i32, i32, i32
  }
}

</mosaic_0001>

<llo_original>
// kernel: tpu_custom_call.1
$region0: #{tpu_custom_call.1}
  #allocation0 [shape = 'u32[]', space=smem, size = 0x4, offset = 0x4, fixed_abs, tag = 'smem constant byte address 0x4 - core index']
  #allocation1 [shape = 'u32[144,128]{1,0:T(1,128)}', space=vmem, size = 0x12000, scoped, tag = 'internal scratch']
  #allocation2 [shape = 'f32[1,1]{1,0:T(1,128)}', space=vmem, size = 0x200, scoped, tag = 'scratch operand']
  %s0 = inlined_call_operand.hbm [shape: f32[8,128], index: 0, kind: input, shape index: {}]
  %s1 = inlined_call_operand.hbm [shape: f32[8,128], index: 1, kind: input, shape index: {}]
  %s2 = inlined_call_operand.hbm [shape: f32[1,1,1], index: 2, kind: output, shape index: {}]
  %s3 = sld [smem:[#allocation0]]
  $region34: #{tpu_custom_call.1} parent=0
    _
  %s5 = ssub.s32 1, %s3
  %s6 = scalar_select 0, %s5, %s3
  $region1: #{tpu_custom_call.1} parent=0
    #allocation3 [shape = 'u8[4096]{0}', space=vmem, size = 0x1000, scoped, tag = 'input window, operand 0, single buffered']
    #allocation4 [shape = 's32[1]{0}', space=sflag, size = 0x4, scoped, tag = 'scoped memory for tpu_custom_call.1']
    #allocation5 [shape = 's32[1]{0}', space=sflag, size = 0x4, scoped, tag = 'scoped memory for tpu_custom_call.1']
    #allocation6 [shape = 'u8[4096]{0}', space=vmem, size = 0x1000, scoped, tag = 'input window, operand 1, single buffered']
    #allocation7 [shape = 's32[1]{0}', space=sflag, size = 0x4, scoped, tag = 'scoped memory for tpu_custom_call.1']
    #allocation8 [shape = 'u8[512]{0}', space=vmem, size = 0x400, scoped, tag = 'output window, operand 0, single buffered']
    %7 = vsyncpa [#allocation4], 0
    %8 = vsyncpa [#allocation7], 0
    %9 = vsyncpa [#allocation5], 0
    // Predicated region
    $region2: #{tpu_custom_call.1} parent=1 // pred_check
      _
    $region3: #{tpu_custom_call.1} parent=1 // pred_check_branch
      %11 = sbr.rel (0) target = $region5
    $region4: #{tpu_custom_call.1} parent=1 // pred_region
      %s12 = sadd.s32 0, 0
      %p13 = scmp.lt.s32.totalorder %s12, 0
      %s14 = scalar_select %p13, %s12, 0
      %s16 = ssub.s32 128, 128
      %17 = vsyncadd [#allocation4], %s16
      %s18 = smul.addr %s14, 128
      %s19 = scalar_lea.hbm %s0, %s18
      %s21 = sshll.u32 [#allocation3], 4
      %s22 = int_to_ptr.vmem [resolvable:$true] %s21
      %24 = dma.hbm_to_vmem [thread:$0]  %s19, 128, %s22, [#allocation4]
    $region5: #{tpu_custom_call.1} parent=1 // pred_fallthru
      _
    // Predicated region
    $region6: #{tpu_custom_call.1} parent=1 // pred_check
      _
    $region7: #{tpu_custom_call.1} parent=1 // pred_check_branch
      %26 = sbr.rel (0) target = $region9
    $region8: #{tpu_custom_call.1} parent=1 // pred_region
      %s27 = sadd.s32 0, 0
      %p28 = scmp.lt.s32.totalorder %s27, 0
      %s29 = scalar_select %p28, %s27, 0
      %s31 = ssub.s32 128, 128
      %32 = vsyncadd [#allocation7], %s31
      %s33 = smul.addr %s29, 128
      %s34 = scalar_lea.hbm %s1, %s33
      %s36 = sshll.u32 [#allocation6], 4
      %s37 = int_to_ptr.vmem [resolvable:$true] %s36
      %39 = dma.hbm_to_vmem [thread:$0]  %s34, 128, %s37, [#allocation7]
    $region9: #{tpu_custom_call.1} parent=1 // pred_fallthru
      _
    // Predicated region
    $region10: #{tpu_custom_call.1} parent=1 // pred_check
      _
    $region11: #{tpu_custom_call.1} parent=1 // pred_check_branch
      %41 = sbr.rel (0) target = $region13
    $region12: #{tpu_custom_call.1} parent=1 // pred_region
      %42 = dma.done [#allocation4], 128
    $region13: #{tpu_custom_call.1} parent=1 // pred_fallthru
      _
    // Predicated region
    $region14: #{tpu_custom_call.1} parent=1 // pred_check
      _
    $region15: #{tpu_custom_call.1} parent=1 // pred_check_branch
      %44 = sbr.rel (0) target = $region17
    $region16: #{tpu_custom_call.1} parent=1 // pred_region
      %45 = dma.done [#allocation7], 128
    $region17: #{tpu_custom_call.1} parent=1 // pred_fallthru
      _
    %s46 = sadd.s32 0, 0
    %p47 = scmp.lt.s32.totalorder %s46, 0
    %s48 = scalar_select %p47, %s46, 0
    %s49 = sadd.s32 0, 0
    %p50 = scmp.lt.s32.totalorder %s49, 0
    %s51 = scalar_select %p50, %s49, 0
    %p52 = scmp.eq.s32.totalorder 0, 0
    // Predicated region
    $region18: #{tpu_custom_call.1} parent=1 // pred_check
      %p53 = pneg %p52
    $region19: #{tpu_custom_call.1} parent=1 // pred_check_branch
      %55 = sbr.rel (%p53) target = $region21
    $region20: #{tpu_custom_call.1} parent=1 // pred_region
      %vm56 = vcmask 0
      %57 = vst.msk [vmem:[#allocation2] sm:$0x1] %vm56, 0.0
    $region21: #{tpu_custom_call.1} parent=1 // pred_fallthru
      _
    %v58 = vld [vmem:[#allocation3] sm:$0xff]
    %v59 = vld [vmem:[#allocation6] sm:$0xff]
    %60 = vmax.xlane.f32.xlu0 %v58
    %v61 = vpop.xlane.xlu0 %60
    %v62 = vsub.f32 %v58, %v61
    %v63 = vmul.f32 %v62, 1.442695
    %v64 = vpow.pop %v63
    %65 = vadd.xlane.f32.xlu0 %v64
    %v66 = vpop.xlane.xlu0 %65
    %v67 = vlog2.pop %v66
    %v68 = vmul.f32 %v67, 0.6931472
    %v69 = vsub.f32 %v62, %v68
    %v70 = vmul.f32 %v59, %v69
    %71 = vadd.xlane.f32.xlu0 %v70
    %v72 = vpop.xlane.xlu0 %71
    %v73 = vsub.f32 0.0, %v72
    %v74 = vld [vmem:[#allocation2] sm:$0x1]
    %vm75 = vcmask 7168
    %v76 = vsel %vm75, %v73, 0.0
    %77 = vadd.xlane.f32.xlu0 %v76
    %v78 = vpop.xlane.xlu0 %77
    %v79 = vrot.slane %v78, 4
    %v80 = vadd.f32 %v78, %v79
    %v81 = vrot.slane %v80, 2
    %v82 = vadd.f32 %v80, %v81
    %v83 = vrot.slane %v82, 1
    %v84 = vadd.f32 %v82, %v83
    %s85 = vtos %v84
    %v86 = vstv %s85
    %v87 = vadd.f32 %v74, %v86
    %vm88 = vcmask 0
    %89 = vst.msk [vmem:[#allocation2] sm:$0x1] %vm88, %v87
    // Predicated region
    $region22: #{tpu_custom_call.1} parent=1 // pred_check
      %p90 = pneg %p52
    $region23: #{tpu_custom_call.1} parent=1 // pred_check_branch
      %92 = sbr.rel (%p90) target = $region25
    $region24: #{tpu_custom_call.1} parent=1 // pred_region
      %v93 = vld [vmem:[#allocation2] sm:$0x1]
      %94 = vst.msk [vmem:[#allocation8] sm:$0x1] %vm88, %v93
    $region25: #{tpu_custom_call.1} parent=1 // pred_fallthru
      _
    // Predicated region
    $region26: #{tpu_custom_call.1} parent=1 // pred_check
      _
    $region27: #{tpu_custom_call.1} parent=1 // pred_check_branch
      %96 = sbr.rel (0) target = $region29
    $region28: #{tpu_custom_call.1} parent=1 // pred_region
      %s98 = ssub.s32 16, 16
      %99 = vsyncadd [#allocation5], %s98
      %s101 = sshll.u32 [#allocation8], 4
      %s102 = int_to_ptr.vmem [resolvable:$true] %s101
      %104 = dma.vmem_to_hbm [thread:$0]  %s102, 16, %s2, [#allocation5]
    $region29: #{tpu_custom_call.1} parent=1 // pred_fallthru
      _
    // Predicated region
    $region30: #{tpu_custom_call.1} parent=1 // pred_check
      _
    $region31: #{tpu_custom_call.1} parent=1 // pred_check_branch
      %106 = sbr.rel (0) target = $region33
    $region32: #{tpu_custom_call.1} parent=1 // pred_region
      %107 = dma.done [#allocation5], 16
    $region33: #{tpu_custom_call.1} parent=1 // pred_fallthru
      _
    %108 = vsyncpa [#allocation4], 1
    %109 = vsyncpa [#allocation7], 1
    %110 = vsyncpa [#allocation5], 1

</llo_original>
